<compile_context>
chip_gen: v6e
topology: v6e:2x2x1
jax: 0.10.0
libtpu: 0.0.40
codegen_flags: <defaults>
</compile_context>

<pallas_src>
import functools

import jax
import jax.numpy as jnp
from jax import lax
from jax.experimental import pallas as pl
from jax.experimental.pallas import tpu as pltpu

HID = 10           # hidden width of the MLP
LANES = 128        # samples per lane-row
BLOCK_ROWS = 1024  # DMA row tile (multiple of 8); 1024x128 samples = 512 KiB / tile
CHUNK_ROWS = 16    # in-kernel compute chunk (rows); keeps ~26-30 vregs live

# Offsets into the packed parameter vector (single SMEM operand).
OFF_W1 = 0                      # (10,)  fc1 weight, stored as (in=1, out=10)
OFF_B1 = OFF_W1 + HID           # (10,)  fc1 bias
OFF_W2 = OFF_B1 + HID           # (100,) fc2 weight, row-major (in j, out k)
OFF_B2 = OFF_W2 + HID * HID     # (10,)  fc2 bias
OFF_W3 = OFF_B2 + HID           # (10,)  fc3 weight, (in=10, out=1)
OFF_B3 = OFF_W3 + HID           # (1,)   fc3 bias
N_PARAMS = OFF_B3 + 1           # 141 scalars total


def deepfc_kernel(p_ref, x_ref, o_ref, *, chunk):
    """p_ref: (141,) f32 in SMEM.  x_ref/o_ref: (TR, 128) f32 in VMEM.

    Every element of x_ref is an independent sample; all math is elementwise
    broadcast on the VPU. Padded tail samples produce benign values that the
    wrapper slices off. The row tile is processed in `chunk`-row pieces so the
    10 fc2 accumulators stay register-resident (no VMEM spill traffic).
    """
    # --- Hoist all 141 SMEM scalar reads: exactly once per grid step. ---
    w1 = [p_ref[OFF_W1 + j] for j in range(HID)]
    b1 = [p_ref[OFF_B1 + j] for j in range(HID)]
    w2 = [[p_ref[OFF_W2 + j * HID + k] for k in range(HID)] for j in range(HID)]
    b2 = [p_ref[OFF_B2 + k] for k in range(HID)]
    w3 = [p_ref[OFF_W3 + k] for k in range(HID)]
    b3 = p_ref[OFF_B3]

    n_chunks = x_ref.shape[0] // chunk  # static

    def body(c, carry):
        start = pl.multiple_of(c * chunk, chunk)
        xc = x_ref[pl.ds(start, chunk), :]                       # (chunk, 128)

        # fc2 accumulators start at their biases (j-outer accumulation).
        acc = [jnp.full_like(xc, b2[k]) for k in range(HID)]

        for j in range(HID):
            # fc1 unit j + ReLU: rank-1 broadcast multiply (VPU).
            h1j = jnp.maximum(xc * w1[j] + b1[j], 0.0)
            # fc2 partial sums: acc[k] += w2[j, k] * h1j
            for k in range(HID):
                acc[k] = acc[k] + h1j * w2[j][k]

        # ReLU on fc2 output, then fc3 weighted sum + bias.
        out = jnp.full_like(xc, b3)
        for k in range(HID):
            out = out + jnp.maximum(acc[k], 0.0) * w3[k]

        o_ref[pl.ds(start, chunk), :] = out.astype(o_ref.dtype)
        return carry

    lax.fori_loop(0, n_chunks, body, 0)


def pack_params(params):
    """Pack (w1, b1, w2, b2, w3, b3) into one flat f32 vector of length 141.

    Weights are stored as (in, out), i.e. already transposed relative to
    PyTorch's (out, in), so the math is y = x @ W + b.
    """
    w1, b1, w2, b2, w3, b3 = params
    return jnp.concatenate([
        w1.reshape(-1), b1.reshape(-1),
        w2.reshape(-1), b2.reshape(-1),   # row-major: flat[j*10 + k] = w2[j, k]
        w3.reshape(-1), b3.reshape(-1),
    ]).astype(jnp.float32)


def deepfc_forward(x, params, block_rows=BLOCK_ROWS):
    """x: (N, 1) float32 -> (N, 1) float32."""
    p_flat = pack_params(params)
    assert p_flat.shape == (N_PARAMS,)

    n = x.shape[0]
    rows = -(-n // LANES)                      # 128-sample rows needed
    rows8 = ((rows + 7) // 8) * 8              # min legal tile granularity

    # Row tile: large DMA tile for HBM efficiency, but capped so mid-size
    # batches still produce >= ~4 grid steps (v7x megacore sharding).
    tr = min(block_rows, rows8)
    if rows8 > 8:
        quarter = ((-(-rows8 // 4)) + 7) // 8 * 8
        tr = min(tr, max(8, quarter))

    rows_pad = -(-rows // tr) * tr
    n_pad = rows_pad * LANES

    # In-kernel compute chunk: largest of {16, 8} rows that divides the tile.
    chunk = CHUNK_ROWS if tr % CHUNK_ROWS == 0 else 8

    # Compact, lane-dense layout: sample s -> (s // 128, s % 128).
    x_flat = x.reshape(-1).astype(jnp.float32)
    if n_pad != n:                              # skip the pad pass when aligned
        x_flat = jnp.zeros((n_pad,), jnp.float32).at[:n].set(x_flat)
    x2 = x_flat.reshape(rows_pad, LANES)

    smem_spec = pl.BlockSpec(memory_space=pltpu.MemorySpace.SMEM)

    out2 = pl.pallas_call(
        functools.partial(deepfc_kernel, chunk=chunk),
        out_shape=jax.ShapeDtypeStruct((rows_pad, LANES), jnp.float32),
        grid_spec=pltpu.PrefetchScalarGridSpec(
            num_scalar_prefetch=0,
            grid=(rows_pad // tr,),
            in_specs=[
                smem_spec,                                    # packed params
                pl.BlockSpec((tr, LANES), lambda i: (i, 0)),  # x tile
            ],
            out_specs=pl.BlockSpec((tr, LANES), lambda i: (i, 0)),
        ),
        compiler_params=pltpu.CompilerParams(
            dimension_semantics=("parallel",)),
    )(p_flat, x2)

    # Un-pad: logical output is (N, 1). Skip the slice copy when aligned.
    out = out2.reshape(n_pad, 1)
    if n_pad != n:
        out = out[:n, :]
    return out


def init_params(key):
    """Deterministic synthetic init matching the PyTorch layer shapes
    (fc1: 1->10, fc2: 10->10, fc3: 10->1), stored as (in, out)."""
    ks = jax.random.split(key, 6)
    w1 = jax.random.normal(ks[0], (1, HID), jnp.float32) * 0.5
    b1 = jax.random.normal(ks[1], (HID,), jnp.float32) * 0.1
    w2 = jax.random.normal(ks[2], (HID, HID), jnp.float32) * 0.3
    b2 = jax.random.normal(ks[3], (HID,), jnp.float32) * 0.1
    w3 = jax.random.normal(ks[4], (HID, 1), jnp.float32) * 0.3
    b3 = jax.random.normal(ks[5], (1,), jnp.float32) * 0.1
    return (w1, b1, w2, b2, w3, b3)


def reference_forward(x, params):
    w1, b1, w2, b2, w3, b3 = params
    h1 = jnp.maximum(x @ w1 + b1, 0.0)
    h2 = jnp.maximum(h1 @ w2 + b2, 0.0)
    return h2 @ w3 + b3


if __name__ == "__main__":
    key = jax.random.PRNGKey(0)
    k_param, k_x1, k_x2 = jax.random.split(key, 3)

    params = init_params(k_param)

    # Small batch of scalar inputs, matching nn.Linear(1, ...) semantics.
    N1 = 100
    x1 = jax.random.normal(k_x1, (N1, 1), jnp.float32)
    out1 = jax.block_until_ready(deepfc_forward(x1, params))
    ref1 = reference_forward(x1, params)
    assert out1.shape == (N1, 1), out1.shape
    assert jnp.allclose(out1, ref1, atol=1e-4, rtol=1e-4)

    # Second, 128-aligned batch: exercises the multi-step grid, the in-kernel
    # chunk loop, and the no-pad / no-slice fast path.
    N2 = 2048
    x2 = jax.random.normal(k_x2, (N2, 1), jnp.float32)
    out2 = jax.block_until_ready(deepfc_forward(x2, params))
    ref2 = reference_forward(x2, params)
    assert out2.shape == (N2, 1), out2.shape
    assert jnp.allclose(out2, ref2, atol=1e-4, rtol=1e-4)

    print("KERNEL_OK")
</pallas_src>

<mosaic_0001>
module attributes {stable_mosaic.version = 11 : i64} {
  func.func @deepfc_kernel(%arg0: i32, %arg1: memref<141xf32, #tpu.memory_space<smem>>, %arg2: memref<8x128xf32, #tpu.memory_space<vmem>>, %arg3: memref<8x128xf32, #tpu.memory_space<vmem>>) attributes {dimension_semantics = [#tpu.dimension_semantics<parallel>], iteration_bounds = array<i64: 1>, scalar_prefetch = 0 : i64, scratch_operands = 0 : i64, tpu.core_type = #tpu.core_type<tc>, window_params = [{transform_indices = @transform_0, window_bounds = array<i64: 141>}, {transform_indices = @transform_1, window_bounds = array<i64: 8, 128>}, {transform_indices = @transform_2, window_bounds = array<i64: 8, 128>}]} {
    %c0 = arith.constant 0 : index
    %0 = memref.load %arg1[%c0] : memref<141xf32, #tpu.memory_space<smem>>
    %c1 = arith.constant 1 : index
    %1 = memref.load %arg1[%c1] : memref<141xf32, #tpu.memory_space<smem>>
    %c2 = arith.constant 2 : index
    %2 = memref.load %arg1[%c2] : memref<141xf32, #tpu.memory_space<smem>>
    %c3 = arith.constant 3 : index
    %3 = memref.load %arg1[%c3] : memref<141xf32, #tpu.memory_space<smem>>
    %c4 = arith.constant 4 : index
    %4 = memref.load %arg1[%c4] : memref<141xf32, #tpu.memory_space<smem>>
    %c5 = arith.constant 5 : index
    %5 = memref.load %arg1[%c5] : memref<141xf32, #tpu.memory_space<smem>>
    %c6 = arith.constant 6 : index
    %6 = memref.load %arg1[%c6] : memref<141xf32, #tpu.memory_space<smem>>
    %c7 = arith.constant 7 : index
    %7 = memref.load %arg1[%c7] : memref<141xf32, #tpu.memory_space<smem>>
    %c8 = arith.constant 8 : index
    %8 = memref.load %arg1[%c8] : memref<141xf32, #tpu.memory_space<smem>>
    %c9 = arith.constant 9 : index
    %9 = memref.load %arg1[%c9] : memref<141xf32, #tpu.memory_space<smem>>
    %c10 = arith.constant 10 : index
    %10 = memref.load %arg1[%c10] : memref<141xf32, #tpu.memory_space<smem>>
    %c11 = arith.constant 11 : index
    %11 = memref.load %arg1[%c11] : memref<141xf32, #tpu.memory_space<smem>>
    %c12 = arith.constant 12 : index
    %12 = memref.load %arg1[%c12] : memref<141xf32, #tpu.memory_space<smem>>
    %c13 = arith.constant 13 : index
    %13 = memref.load %arg1[%c13] : memref<141xf32, #tpu.memory_space<smem>>
    %c14 = arith.constant 14 : index
    %14 = memref.load %arg1[%c14] : memref<141xf32, #tpu.memory_space<smem>>
    %c15 = arith.constant 15 : index
    %15 = memref.load %arg1[%c15] : memref<141xf32, #tpu.memory_space<smem>>
    %c16 = arith.constant 16 : index
    %16 = memref.load %arg1[%c16] : memref<141xf32, #tpu.memory_space<smem>>
    %c17 = arith.constant 17 : index
    %17 = memref.load %arg1[%c17] : memref<141xf32, #tpu.memory_space<smem>>
    %c18 = arith.constant 18 : index
    %18 = memref.load %arg1[%c18] : memref<141xf32, #tpu.memory_space<smem>>
    %c19 = arith.constant 19 : index
    %19 = memref.load %arg1[%c19] : memref<141xf32, #tpu.memory_space<smem>>
    %c20 = arith.constant 20 : index
    %20 = memref.load %arg1[%c20] : memref<141xf32, #tpu.memory_space<smem>>
    %c21 = arith.constant 21 : index
    %21 = memref.load %arg1[%c21] : memref<141xf32, #tpu.memory_space<smem>>
    %c22 = arith.constant 22 : index
    %22 = memref.load %arg1[%c22] : memref<141xf32, #tpu.memory_space<smem>>
    %c23 = arith.constant 23 : index
    %23 = memref.load %arg1[%c23] : memref<141xf32, #tpu.memory_space<smem>>
    %c24 = arith.constant 24 : index
    %24 = memref.load %arg1[%c24] : memref<141xf32, #tpu.memory_space<smem>>
    %c25 = arith.constant 25 : index
    %25 = memref.load %arg1[%c25] : memref<141xf32, #tpu.memory_space<smem>>
    %c26 = arith.constant 26 : index
    %26 = memref.load %arg1[%c26] : memref<141xf32, #tpu.memory_space<smem>>
    %c27 = arith.constant 27 : index
    %27 = memref.load %arg1[%c27] : memref<141xf32, #tpu.memory_space<smem>>
    %c28 = arith.constant 28 : index
    %28 = memref.load %arg1[%c28] : memref<141xf32, #tpu.memory_space<smem>>
    %c29 = arith.constant 29 : index
    %29 = memref.load %arg1[%c29] : memref<141xf32, #tpu.memory_space<smem>>
    %c30 = arith.constant 30 : index
    %30 = memref.load %arg1[%c30] : memref<141xf32, #tpu.memory_space<smem>>
    %c31 = arith.constant 31 : index
    %31 = memref.load %arg1[%c31] : memref<141xf32, #tpu.memory_space<smem>>
    %c32 = arith.constant 32 : index
    %32 = memref.load %arg1[%c32] : memref<141xf32, #tpu.memory_space<smem>>
    %c33 = arith.constant 33 : index
    %33 = memref.load %arg1[%c33] : memref<141xf32, #tpu.memory_space<smem>>
    %c34 = arith.constant 34 : index
    %34 = memref.load %arg1[%c34] : memref<141xf32, #tpu.memory_space<smem>>
    %c35 = arith.constant 35 : index
    %35 = memref.load %arg1[%c35] : memref<141xf32, #tpu.memory_space<smem>>
    %c36 = arith.constant 36 : index
    %36 = memref.load %arg1[%c36] : memref<141xf32, #tpu.memory_space<smem>>
    %c37 = arith.constant 37 : index
    %37 = memref.load %arg1[%c37] : memref<141xf32, #tpu.memory_space<smem>>
    %c38 = arith.constant 38 : index
    %38 = memref.load %arg1[%c38] : memref<141xf32, #tpu.memory_space<smem>>
    %c39 = arith.constant 39 : index
    %39 = memref.load %arg1[%c39] : memref<141xf32, #tpu.memory_space<smem>>
    %c40 = arith.constant 40 : index
    %40 = memref.load %arg1[%c40] : memref<141xf32, #tpu.memory_space<smem>>
    %c41 = arith.constant 41 : index
    %41 = memref.load %arg1[%c41] : memref<141xf32, #tpu.memory_space<smem>>
    %c42 = arith.constant 42 : index
    %42 = memref.load %arg1[%c42] : memref<141xf32, #tpu.memory_space<smem>>
    %c43 = arith.constant 43 : index
    %43 = memref.load %arg1[%c43] : memref<141xf32, #tpu.memory_space<smem>>
    %c44 = arith.constant 44 : index
    %44 = memref.load %arg1[%c44] : memref<141xf32, #tpu.memory_space<smem>>
    %c45 = arith.constant 45 : index
    %45 = memref.load %arg1[%c45] : memref<141xf32, #tpu.memory_space<smem>>
    %c46 = arith.constant 46 : index
    %46 = memref.load %arg1[%c46] : memref<141xf32, #tpu.memory_space<smem>>
    %c47 = arith.constant 47 : index
    %47 = memref.load %arg1[%c47] : memref<141xf32, #tpu.memory_space<smem>>
    %c48 = arith.constant 48 : index
    %48 = memref.load %arg1[%c48] : memref<141xf32, #tpu.memory_space<smem>>
    %c49 = arith.constant 49 : index
    %49 = memref.load %arg1[%c49] : memref<141xf32, #tpu.memory_space<smem>>
    %c50 = arith.constant 50 : index
    %50 = memref.load %arg1[%c50] : memref<141xf32, #tpu.memory_space<smem>>
    %c51 = arith.constant 51 : index
    %51 = memref.load %arg1[%c51] : memref<141xf32, #tpu.memory_space<smem>>
    %c52 = arith.constant 52 : index
    %52 = memref.load %arg1[%c52] : memref<141xf32, #tpu.memory_space<smem>>
    %c53 = arith.constant 53 : index
    %53 = memref.load %arg1[%c53] : memref<141xf32, #tpu.memory_space<smem>>
    %c54 = arith.constant 54 : index
    %54 = memref.load %arg1[%c54] : memref<141xf32, #tpu.memory_space<smem>>
    %c55 = arith.constant 55 : index
    %55 = memref.load %arg1[%c55] : memref<141xf32, #tpu.memory_space<smem>>
    %c56 = arith.constant 56 : index
    %56 = memref.load %arg1[%c56] : memref<141xf32, #tpu.memory_space<smem>>
    %c57 = arith.constant 57 : index
    %57 = memref.load %arg1[%c57] : memref<141xf32, #tpu.memory_space<smem>>
    %c58 = arith.constant 58 : index
    %58 = memref.load %arg1[%c58] : memref<141xf32, #tpu.memory_space<smem>>
    %c59 = arith.constant 59 : index
    %59 = memref.load %arg1[%c59] : memref<141xf32, #tpu.memory_space<smem>>
    %c60 = arith.constant 60 : index
    %60 = memref.load %arg1[%c60] : memref<141xf32, #tpu.memory_space<smem>>
    %c61 = arith.constant 61 : index
    %61 = memref.load %arg1[%c61] : memref<141xf32, #tpu.memory_space<smem>>
    %c62 = arith.constant 62 : index
    %62 = memref.load %arg1[%c62] : memref<141xf32, #tpu.memory_space<smem>>
    %c63 = arith.constant 63 : index
    %63 = memref.load %arg1[%c63] : memref<141xf32, #tpu.memory_space<smem>>
    %c64 = arith.constant 64 : index
    %64 = memref.load %arg1[%c64] : memref<141xf32, #tpu.memory_space<smem>>
    %c65 = arith.constant 65 : index
    %65 = memref.load %arg1[%c65] : memref<141xf32, #tpu.memory_space<smem>>
    %c66 = arith.constant 66 : index
    %66 = memref.load %arg1[%c66] : memref<141xf32, #tpu.memory_space<smem>>
    %c67 = arith.constant 67 : index
    %67 = memref.load %arg1[%c67] : memref<141xf32, #tpu.memory_space<smem>>
    %c68 = arith.constant 68 : index
    %68 = memref.load %arg1[%c68] : memref<141xf32, #tpu.memory_space<smem>>
    %c69 = arith.constant 69 : index
    %69 = memref.load %arg1[%c69] : memref<141xf32, #tpu.memory_space<smem>>
    %c70 = arith.constant 70 : index
    %70 = memref.load %arg1[%c70] : memref<141xf32, #tpu.memory_space<smem>>
    %c71 = arith.constant 71 : index
    %71 = memref.load %arg1[%c71] : memref<141xf32, #tpu.memory_space<smem>>
    %c72 = arith.constant 72 : index
    %72 = memref.load %arg1[%c72] : memref<141xf32, #tpu.memory_space<smem>>
    %c73 = arith.constant 73 : index
    %73 = memref.load %arg1[%c73] : memref<141xf32, #tpu.memory_space<smem>>
    %c74 = arith.constant 74 : index
    %74 = memref.load %arg1[%c74] : memref<141xf32, #tpu.memory_space<smem>>
    %c75 = arith.constant 75 : index
    %75 = memref.load %arg1[%c75] : memref<141xf32, #tpu.memory_space<smem>>
    %c76 = arith.constant 76 : index
    %76 = memref.load %arg1[%c76] : memref<141xf32, #tpu.memory_space<smem>>
    %c77 = arith.constant 77 : index
    %77 = memref.load %arg1[%c77] : memref<141xf32, #tpu.memory_space<smem>>
    %c78 = arith.constant 78 : index
    %78 = memref.load %arg1[%c78] : memref<141xf32, #tpu.memory_space<smem>>
    %c79 = arith.constant 79 : index
    %79 = memref.load %arg1[%c79] : memref<141xf32, #tpu.memory_space<smem>>
    %c80 = arith.constant 80 : index
    %80 = memref.load %arg1[%c80] : memref<141xf32, #tpu.memory_space<smem>>
    %c81 = arith.constant 81 : index
    %81 = memref.load %arg1[%c81] : memref<141xf32, #tpu.memory_space<smem>>
    %c82 = arith.constant 82 : index
    %82 = memref.load %arg1[%c82] : memref<141xf32, #tpu.memory_space<smem>>
    %c83 = arith.constant 83 : index
    %83 = memref.load %arg1[%c83] : memref<141xf32, #tpu.memory_space<smem>>
    %c84 = arith.constant 84 : index
    %84 = memref.load %arg1[%c84] : memref<141xf32, #tpu.memory_space<smem>>
    %c85 = arith.constant 85 : index
    %85 = memref.load %arg1[%c85] : memref<141xf32, #tpu.memory_space<smem>>
    %c86 = arith.constant 86 : index
    %86 = memref.load %arg1[%c86] : memref<141xf32, #tpu.memory_space<smem>>
    %c87 = arith.constant 87 : index
    %87 = memref.load %arg1[%c87] : memref<141xf32, #tpu.memory_space<smem>>
    %c88 = arith.constant 88 : index
    %88 = memref.load %arg1[%c88] : memref<141xf32, #tpu.memory_space<smem>>
    %c89 = arith.constant 89 : index
    %89 = memref.load %arg1[%c89] : memref<141xf32, #tpu.memory_space<smem>>
    %c90 = arith.constant 90 : index
    %90 = memref.load %arg1[%c90] : memref<141xf32, #tpu.memory_space<smem>>
    %c91 = arith.constant 91 : index
    %91 = memref.load %arg1[%c91] : memref<141xf32, #tpu.memory_space<smem>>
    %c92 = arith.constant 92 : index
    %92 = memref.load %arg1[%c92] : memref<141xf32, #tpu.memory_space<smem>>
    %c93 = arith.constant 93 : index
    %93 = memref.load %arg1[%c93] : memref<141xf32, #tpu.memory_space<smem>>
    %c94 = arith.constant 94 : index
    %94 = memref.load %arg1[%c94] : memref<141xf32, #tpu.memory_space<smem>>
    %c95 = arith.constant 95 : index
    %95 = memref.load %arg1[%c95] : memref<141xf32, #tpu.memory_space<smem>>
    %c96 = arith.constant 96 : index
    %96 = memref.load %arg1[%c96] : memref<141xf32, #tpu.memory_space<smem>>
    %c97 = arith.constant 97 : index
    %97 = memref.load %arg1[%c97] : memref<141xf32, #tpu.memory_space<smem>>
    %c98 = arith.constant 98 : index
    %98 = memref.load %arg1[%c98] : memref<141xf32, #tpu.memory_space<smem>>
    %c99 = arith.constant 99 : index
    %99 = memref.load %arg1[%c99] : memref<141xf32, #tpu.memory_space<smem>>
    %c100 = arith.constant 100 : index
    %100 = memref.load %arg1[%c100] : memref<141xf32, #tpu.memory_space<smem>>
    %c101 = arith.constant 101 : index
    %101 = memref.load %arg1[%c101] : memref<141xf32, #tpu.memory_space<smem>>
    %c102 = arith.constant 102 : index
    %102 = memref.load %arg1[%c102] : memref<141xf32, #tpu.memory_space<smem>>
    %c103 = arith.constant 103 : index
    %103 = memref.load %arg1[%c103] : memref<141xf32, #tpu.memory_space<smem>>
    %c104 = arith.constant 104 : index
    %104 = memref.load %arg1[%c104] : memref<141xf32, #tpu.memory_space<smem>>
    %c105 = arith.constant 105 : index
    %105 = memref.load %arg1[%c105] : memref<141xf32, #tpu.memory_space<smem>>
    %c106 = arith.constant 106 : index
    %106 = memref.load %arg1[%c106] : memref<141xf32, #tpu.memory_space<smem>>
    %c107 = arith.constant 107 : index
    %107 = memref.load %arg1[%c107] : memref<141xf32, #tpu.memory_space<smem>>
    %c108 = arith.constant 108 : index
    %108 = memref.load %arg1[%c108] : memref<141xf32, #tpu.memory_space<smem>>
    %c109 = arith.constant 109 : index
    %109 = memref.load %arg1[%c109] : memref<141xf32, #tpu.memory_space<smem>>
    %c110 = arith.constant 110 : index
    %110 = memref.load %arg1[%c110] : memref<141xf32, #tpu.memory_space<smem>>
    %c111 = arith.constant 111 : index
    %111 = memref.load %arg1[%c111] : memref<141xf32, #tpu.memory_space<smem>>
    %c112 = arith.constant 112 : index
    %112 = memref.load %arg1[%c112] : memref<141xf32, #tpu.memory_space<smem>>
    %c113 = arith.constant 113 : index
    %113 = memref.load %arg1[%c113] : memref<141xf32, #tpu.memory_space<smem>>
    %c114 = arith.constant 114 : index
    %114 = memref.load %arg1[%c114] : memref<141xf32, #tpu.memory_space<smem>>
    %c115 = arith.constant 115 : index
    %115 = memref.load %arg1[%c115] : memref<141xf32, #tpu.memory_space<smem>>
    %c116 = arith.constant 116 : index
    %116 = memref.load %arg1[%c116] : memref<141xf32, #tpu.memory_space<smem>>
    %c117 = arith.constant 117 : index
    %117 = memref.load %arg1[%c117] : memref<141xf32, #tpu.memory_space<smem>>
    %c118 = arith.constant 118 : index
    %118 = memref.load %arg1[%c118] : memref<141xf32, #tpu.memory_space<smem>>
    %c119 = arith.constant 119 : index
    %119 = memref.load %arg1[%c119] : memref<141xf32, #tpu.memory_space<smem>>
    %c120 = arith.constant 120 : index
    %120 = memref.load %arg1[%c120] : memref<141xf32, #tpu.memory_space<smem>>
    %c121 = arith.constant 121 : index
    %121 = memref.load %arg1[%c121] : memref<141xf32, #tpu.memory_space<smem>>
    %c122 = arith.constant 122 : index
    %122 = memref.load %arg1[%c122] : memref<141xf32, #tpu.memory_space<smem>>
    %c123 = arith.constant 123 : index
    %123 = memref.load %arg1[%c123] : memref<141xf32, #tpu.memory_space<smem>>
    %c124 = arith.constant 124 : index
    %124 = memref.load %arg1[%c124] : memref<141xf32, #tpu.memory_space<smem>>
    %c125 = arith.constant 125 : index
    %125 = memref.load %arg1[%c125] : memref<141xf32, #tpu.memory_space<smem>>
    %c126 = arith.constant 126 : index
    %126 = memref.load %arg1[%c126] : memref<141xf32, #tpu.memory_space<smem>>
    %c127 = arith.constant 127 : index
    %127 = memref.load %arg1[%c127] : memref<141xf32, #tpu.memory_space<smem>>
    %c128 = arith.constant 128 : index
    %128 = memref.load %arg1[%c128] : memref<141xf32, #tpu.memory_space<smem>>
    %c129 = arith.constant 129 : index
    %129 = memref.load %arg1[%c129] : memref<141xf32, #tpu.memory_space<smem>>
    %c130 = arith.constant 130 : index
    %130 = memref.load %arg1[%c130] : memref<141xf32, #tpu.memory_space<smem>>
    %c131 = arith.constant 131 : index
    %131 = memref.load %arg1[%c131] : memref<141xf32, #tpu.memory_space<smem>>
    %c132 = arith.constant 132 : index
    %132 = memref.load %arg1[%c132] : memref<141xf32, #tpu.memory_space<smem>>
    %c133 = arith.constant 133 : index
    %133 = memref.load %arg1[%c133] : memref<141xf32, #tpu.memory_space<smem>>
    %c134 = arith.constant 134 : index
    %134 = memref.load %arg1[%c134] : memref<141xf32, #tpu.memory_space<smem>>
    %c135 = arith.constant 135 : index
    %135 = memref.load %arg1[%c135] : memref<141xf32, #tpu.memory_space<smem>>
    %c136 = arith.constant 136 : index
    %136 = memref.load %arg1[%c136] : memref<141xf32, #tpu.memory_space<smem>>
    %c137 = arith.constant 137 : index
    %137 = memref.load %arg1[%c137] : memref<141xf32, #tpu.memory_space<smem>>
    %c138 = arith.constant 138 : index
    %138 = memref.load %arg1[%c138] : memref<141xf32, #tpu.memory_space<smem>>
    %c139 = arith.constant 139 : index
    %139 = memref.load %arg1[%c139] : memref<141xf32, #tpu.memory_space<smem>>
    %c140 = arith.constant 140 : index
    %140 = memref.load %arg1[%c140] : memref<141xf32, #tpu.memory_space<smem>>
    %c0_i32 = arith.constant 0 : i32
    %c8_i32 = arith.constant 8 : i32
    %141 = arith.muli %c0_i32, %c8_i32 : i32
    %142 = tpu.assume_multiple %141, 8 : i32
    %143 = arith.index_cast %142 : i32 to index
    %c0_0 = arith.constant 0 : index
    %144 = vector.load %arg2[%143, %c0_0] : memref<8x128xf32, #tpu.memory_space<vmem>>, vector<8x128xf32>
    %145 = vector.broadcast %120 : f32 to vector<8x128xf32>
    %146 = vector.broadcast %121 : f32 to vector<8x128xf32>
    %147 = vector.broadcast %122 : f32 to vector<8x128xf32>
    %148 = vector.broadcast %123 : f32 to vector<8x128xf32>
    %149 = vector.broadcast %124 : f32 to vector<8x128xf32>
    %150 = vector.broadcast %125 : f32 to vector<8x128xf32>
    %151 = vector.broadcast %126 : f32 to vector<8x128xf32>
    %152 = vector.broadcast %127 : f32 to vector<8x128xf32>
    %153 = vector.broadcast %128 : f32 to vector<8x128xf32>
    %154 = vector.broadcast %129 : f32 to vector<8x128xf32>
    %155 = vector.broadcast %0 : f32 to vector<8x128xf32>
    %156 = arith.mulf %144, %155 : vector<8x128xf32>
    %157 = vector.broadcast %10 : f32 to vector<8x128xf32>
    %158 = arith.addf %156, %157 : vector<8x128xf32>
    %cst = arith.constant 0.000000e+00 : f32
    %159 = vector.broadcast %cst : f32 to vector<8x128xf32>
    %160 = arith.maximumf %158, %159 : vector<8x128xf32>
    %161 = vector.broadcast %20 : f32 to vector<8x128xf32>
    %162 = arith.mulf %160, %161 : vector<8x128xf32>
    %163 = arith.addf %145, %162 : vector<8x128xf32>
    %164 = vector.broadcast %21 : f32 to vector<8x128xf32>
    %165 = arith.mulf %160, %164 : vector<8x128xf32>
    %166 = arith.addf %146, %165 : vector<8x128xf32>
    %167 = vector.broadcast %22 : f32 to vector<8x128xf32>
    %168 = arith.mulf %160, %167 : vector<8x128xf32>
    %169 = arith.addf %147, %168 : vector<8x128xf32>
    %170 = vector.broadcast %23 : f32 to vector<8x128xf32>
    %171 = arith.mulf %160, %170 : vector<8x128xf32>
    %172 = arith.addf %148, %171 : vector<8x128xf32>
    %173 = vector.broadcast %24 : f32 to vector<8x128xf32>
    %174 = arith.mulf %160, %173 : vector<8x128xf32>
    %175 = arith.addf %149, %174 : vector<8x128xf32>
    %176 = vector.broadcast %25 : f32 to vector<8x128xf32>
    %177 = arith.mulf %160, %176 : vector<8x128xf32>
    %178 = arith.addf %150, %177 : vector<8x128xf32>
    %179 = vector.broadcast %26 : f32 to vector<8x128xf32>
    %180 = arith.mulf %160, %179 : vector<8x128xf32>
    %181 = arith.addf %151, %180 : vector<8x128xf32>
    %182 = vector.broadcast %27 : f32 to vector<8x128xf32>
    %183 = arith.mulf %160, %182 : vector<8x128xf32>
    %184 = arith.addf %152, %183 : vector<8x128xf32>
    %185 = vector.broadcast %28 : f32 to vector<8x128xf32>
    %186 = arith.mulf %160, %185 : vector<8x128xf32>
    %187 = arith.addf %153, %186 : vector<8x128xf32>
    %188 = vector.broadcast %29 : f32 to vector<8x128xf32>
    %189 = arith.mulf %160, %188 : vector<8x128xf32>
    %190 = arith.addf %154, %189 : vector<8x128xf32>
    %191 = vector.broadcast %1 : f32 to vector<8x128xf32>
    %192 = arith.mulf %144, %191 : vector<8x128xf32>
    %193 = vector.broadcast %11 : f32 to vector<8x128xf32>
    %194 = arith.addf %192, %193 : vector<8x128xf32>
    %cst_1 = arith.constant 0.000000e+00 : f32
    %195 = vector.broadcast %cst_1 : f32 to vector<8x128xf32>
    %196 = arith.maximumf %194, %195 : vector<8x128xf32>
    %197 = vector.broadcast %30 : f32 to vector<8x128xf32>
    %198 = arith.mulf %196, %197 : vector<8x128xf32>
    %199 = arith.addf %163, %198 : vector<8x128xf32>
    %200 = vector.broadcast %31 : f32 to vector<8x128xf32>
    %201 = arith.mulf %196, %200 : vector<8x128xf32>
    %202 = arith.addf %166, %201 : vector<8x128xf32>
    %203 = vector.broadcast %32 : f32 to vector<8x128xf32>
    %204 = arith.mulf %196, %203 : vector<8x128xf32>
    %205 = arith.addf %169, %204 : vector<8x128xf32>
    %206 = vector.broadcast %33 : f32 to vector<8x128xf32>
    %207 = arith.mulf %196, %206 : vector<8x128xf32>
    %208 = arith.addf %172, %207 : vector<8x128xf32>
    %209 = vector.broadcast %34 : f32 to vector<8x128xf32>
    %210 = arith.mulf %196, %209 : vector<8x128xf32>
    %211 = arith.addf %175, %210 : vector<8x128xf32>
    %212 = vector.broadcast %35 : f32 to vector<8x128xf32>
    %213 = arith.mulf %196, %212 : vector<8x128xf32>
    %214 = arith.addf %178, %213 : vector<8x128xf32>
    %215 = vector.broadcast %36 : f32 to vector<8x128xf32>
    %216 = arith.mulf %196, %215 : vector<8x128xf32>
    %217 = arith.addf %181, %216 : vector<8x128xf32>
    %218 = vector.broadcast %37 : f32 to vector<8x128xf32>
    %219 = arith.mulf %196, %218 : vector<8x128xf32>
    %220 = arith.addf %184, %219 : vector<8x128xf32>
    %221 = vector.broadcast %38 : f32 to vector<8x128xf32>
    %222 = arith.mulf %196, %221 : vector<8x128xf32>
    %223 = arith.addf %187, %222 : vector<8x128xf32>
    %224 = vector.broadcast %39 : f32 to vector<8x128xf32>
    %225 = arith.mulf %196, %224 : vector<8x128xf32>
    %226 = arith.addf %190, %225 : vector<8x128xf32>
    %227 = vector.broadcast %2 : f32 to vector<8x128xf32>
    %228 = arith.mulf %144, %227 : vector<8x128xf32>
    %229 = vector.broadcast %12 : f32 to vector<8x128xf32>
    %230 = arith.addf %228, %229 : vector<8x128xf32>
    %cst_2 = arith.constant 0.000000e+00 : f32
    %231 = vector.broadcast %cst_2 : f32 to vector<8x128xf32>
    %232 = arith.maximumf %230, %231 : vector<8x128xf32>
    %233 = vector.broadcast %40 : f32 to vector<8x128xf32>
    %234 = arith.mulf %232, %233 : vector<8x128xf32>
    %235 = arith.addf %199, %234 : vector<8x128xf32>
    %236 = vector.broadcast %41 : f32 to vector<8x128xf32>
    %237 = arith.mulf %232, %236 : vector<8x128xf32>
    %238 = arith.addf %202, %237 : vector<8x128xf32>
    %239 = vector.broadcast %42 : f32 to vector<8x128xf32>
    %240 = arith.mulf %232, %239 : vector<8x128xf32>
    %241 = arith.addf %205, %240 : vector<8x128xf32>
    %242 = vector.broadcast %43 : f32 to vector<8x128xf32>
    %243 = arith.mulf %232, %242 : vector<8x128xf32>
    %244 = arith.addf %208, %243 : vector<8x128xf32>
    %245 = vector.broadcast %44 : f32 to vector<8x128xf32>
    %246 = arith.mulf %232, %245 : vector<8x128xf32>
    %247 = arith.addf %211, %246 : vector<8x128xf32>
    %248 = vector.broadcast %45 : f32 to vector<8x128xf32>
    %249 = arith.mulf %232, %248 : vector<8x128xf32>
    %250 = arith.addf %214, %249 : vector<8x128xf32>
    %251 = vector.broadcast %46 : f32 to vector<8x128xf32>
    %252 = arith.mulf %232, %251 : vector<8x128xf32>
    %253 = arith.addf %217, %252 : vector<8x128xf32>
    %254 = vector.broadcast %47 : f32 to vector<8x128xf32>
    %255 = arith.mulf %232, %254 : vector<8x128xf32>
    %256 = arith.addf %220, %255 : vector<8x128xf32>
    %257 = vector.broadcast %48 : f32 to vector<8x128xf32>
    %258 = arith.mulf %232, %257 : vector<8x128xf32>
    %259 = arith.addf %223, %258 : vector<8x128xf32>
    %260 = vector.broadcast %49 : f32 to vector<8x128xf32>
    %261 = arith.mulf %232, %260 : vector<8x128xf32>
    %262 = arith.addf %226, %261 : vector<8x128xf32>
    %263 = vector.broadcast %3 : f32 to vector<8x128xf32>
    %264 = arith.mulf %144, %263 : vector<8x128xf32>
    %265 = vector.broadcast %13 : f32 to vector<8x128xf32>
    %266 = arith.addf %264, %265 : vector<8x128xf32>
    %cst_3 = arith.constant 0.000000e+00 : f32
    %267 = vector.broadcast %cst_3 : f32 to vector<8x128xf32>
    %268 = arith.maximumf %266, %267 : vector<8x128xf32>
    %269 = vector.broadcast %50 : f32 to vector<8x128xf32>
    %270 = arith.mulf %268, %269 : vector<8x128xf32>
    %271 = arith.addf %235, %270 : vector<8x128xf32>
    %272 = vector.broadcast %51 : f32 to vector<8x128xf32>
    %273 = arith.mulf %268, %272 : vector<8x128xf32>
    %274 = arith.addf %238, %273 : vector<8x128xf32>
    %275 = vector.broadcast %52 : f32 to vector<8x128xf32>
    %276 = arith.mulf %268, %275 : vector<8x128xf32>
    %277 = arith.addf %241, %276 : vector<8x128xf32>
    %278 = vector.broadcast %53 : f32 to vector<8x128xf32>
    %279 = arith.mulf %268, %278 : vector<8x128xf32>
    %280 = arith.addf %244, %279 : vector<8x128xf32>
    %281 = vector.broadcast %54 : f32 to vector<8x128xf32>
    %282 = arith.mulf %268, %281 : vector<8x128xf32>
    %283 = arith.addf %247, %282 : vector<8x128xf32>
    %284 = vector.broadcast %55 : f32 to vector<8x128xf32>
    %285 = arith.mulf %268, %284 : vector<8x128xf32>
    %286 = arith.addf %250, %285 : vector<8x128xf32>
    %287 = vector.broadcast %56 : f32 to vector<8x128xf32>
    %288 = arith.mulf %268, %287 : vector<8x128xf32>
    %289 = arith.addf %253, %288 : vector<8x128xf32>
    %290 = vector.broadcast %57 : f32 to vector<8x128xf32>
    %291 = arith.mulf %268, %290 : vector<8x128xf32>
    %292 = arith.addf %256, %291 : vector<8x128xf32>
    %293 = vector.broadcast %58 : f32 to vector<8x128xf32>
    %294 = arith.mulf %268, %293 : vector<8x128xf32>
    %295 = arith.addf %259, %294 : vector<8x128xf32>
    %296 = vector.broadcast %59 : f32 to vector<8x128xf32>
    %297 = arith.mulf %268, %296 : vector<8x128xf32>
    %298 = arith.addf %262, %297 : vector<8x128xf32>
    %299 = vector.broadcast %4 : f32 to vector<8x128xf32>
    %300 = arith.mulf %144, %299 : vector<8x128xf32>
    %301 = vector.broadcast %14 : f32 to vector<8x128xf32>
    %302 = arith.addf %300, %301 : vector<8x128xf32>
    %cst_4 = arith.constant 0.000000e+00 : f32
    %303 = vector.broadcast %cst_4 : f32 to vector<8x128xf32>
    %304 = arith.maximumf %302, %303 : vector<8x128xf32>
    %305 = vector.broadcast %60 : f32 to vector<8x128xf32>
    %306 = arith.mulf %304, %305 : vector<8x128xf32>
    %307 = arith.addf %271, %306 : vector<8x128xf32>
    %308 = vector.broadcast %61 : f32 to vector<8x128xf32>
    %309 = arith.mulf %304, %308 : vector<8x128xf32>
    %310 = arith.addf %274, %309 : vector<8x128xf32>
    %311 = vector.broadcast %62 : f32 to vector<8x128xf32>
    %312 = arith.mulf %304, %311 : vector<8x128xf32>
    %313 = arith.addf %277, %312 : vector<8x128xf32>
    %314 = vector.broadcast %63 : f32 to vector<8x128xf32>
    %315 = arith.mulf %304, %314 : vector<8x128xf32>
    %316 = arith.addf %280, %315 : vector<8x128xf32>
    %317 = vector.broadcast %64 : f32 to vector<8x128xf32>
    %318 = arith.mulf %304, %317 : vector<8x128xf32>
    %319 = arith.addf %283, %318 : vector<8x128xf32>
    %320 = vector.broadcast %65 : f32 to vector<8x128xf32>
    %321 = arith.mulf %304, %320 : vector<8x128xf32>
    %322 = arith.addf %286, %321 : vector<8x128xf32>
    %323 = vector.broadcast %66 : f32 to vector<8x128xf32>
    %324 = arith.mulf %304, %323 : vector<8x128xf32>
    %325 = arith.addf %289, %324 : vector<8x128xf32>
    %326 = vector.broadcast %67 : f32 to vector<8x128xf32>
    %327 = arith.mulf %304, %326 : vector<8x128xf32>
    %328 = arith.addf %292, %327 : vector<8x128xf32>
    %329 = vector.broadcast %68 : f32 to vector<8x128xf32>
    %330 = arith.mulf %304, %329 : vector<8x128xf32>
    %331 = arith.addf %295, %330 : vector<8x128xf32>
    %332 = vector.broadcast %69 : f32 to vector<8x128xf32>
    %333 = arith.mulf %304, %332 : vector<8x128xf32>
    %334 = arith.addf %298, %333 : vector<8x128xf32>
    %335 = vector.broadcast %5 : f32 to vector<8x128xf32>
    %336 = arith.mulf %144, %335 : vector<8x128xf32>
    %337 = vector.broadcast %15 : f32 to vector<8x128xf32>
    %338 = arith.addf %336, %337 : vector<8x128xf32>
    %cst_5 = arith.constant 0.000000e+00 : f32
    %339 = vector.broadcast %cst_5 : f32 to vector<8x128xf32>
    %340 = arith.maximumf %338, %339 : vector<8x128xf32>
    %341 = vector.broadcast %70 : f32 to vector<8x128xf32>
    %342 = arith.mulf %340, %341 : vector<8x128xf32>
    %343 = arith.addf %307, %342 : vector<8x128xf32>
    %344 = vector.broadcast %71 : f32 to vector<8x128xf32>
    %345 = arith.mulf %340, %344 : vector<8x128xf32>
    %346 = arith.addf %310, %345 : vector<8x128xf32>
    %347 = vector.broadcast %72 : f32 to vector<8x128xf32>
    %348 = arith.mulf %340, %347 : vector<8x128xf32>
    %349 = arith.addf %313, %348 : vector<8x128xf32>
    %350 = vector.broadcast %73 : f32 to vector<8x128xf32>
    %351 = arith.mulf %340, %350 : vector<8x128xf32>
    %352 = arith.addf %316, %351 : vector<8x128xf32>
    %353 = vector.broadcast %74 : f32 to vector<8x128xf32>
    %354 = arith.mulf %340, %353 : vector<8x128xf32>
    %355 = arith.addf %319, %354 : vector<8x128xf32>
    %356 = vector.broadcast %75 : f32 to vector<8x128xf32>
    %357 = arith.mulf %340, %356 : vector<8x128xf32>
    %358 = arith.addf %322, %357 : vector<8x128xf32>
    %359 = vector.broadcast %76 : f32 to vector<8x128xf32>
    %360 = arith.mulf %340, %359 : vector<8x128xf32>
    %361 = arith.addf %325, %360 : vector<8x128xf32>
    %362 = vector.broadcast %77 : f32 to vector<8x128xf32>
    %363 = arith.mulf %340, %362 : vector<8x128xf32>
    %364 = arith.addf %328, %363 : vector<8x128xf32>
    %365 = vector.broadcast %78 : f32 to vector<8x128xf32>
    %366 = arith.mulf %340, %365 : vector<8x128xf32>
    %367 = arith.addf %331, %366 : vector<8x128xf32>
    %368 = vector.broadcast %79 : f32 to vector<8x128xf32>
    %369 = arith.mulf %340, %368 : vector<8x128xf32>
    %370 = arith.addf %334, %369 : vector<8x128xf32>
    %371 = vector.broadcast %6 : f32 to vector<8x128xf32>
    %372 = arith.mulf %144, %371 : vector<8x128xf32>
    %373 = vector.broadcast %16 : f32 to vector<8x128xf32>
    %374 = arith.addf %372, %373 : vector<8x128xf32>
    %cst_6 = arith.constant 0.000000e+00 : f32
    %375 = vector.broadcast %cst_6 : f32 to vector<8x128xf32>
    %376 = arith.maximumf %374, %375 : vector<8x128xf32>
    %377 = vector.broadcast %80 : f32 to vector<8x128xf32>
    %378 = arith.mulf %376, %377 : vector<8x128xf32>
    %379 = arith.addf %343, %378 : vector<8x128xf32>
    %380 = vector.broadcast %81 : f32 to vector<8x128xf32>
    %381 = arith.mulf %376, %380 : vector<8x128xf32>
    %382 = arith.addf %346, %381 : vector<8x128xf32>
    %383 = vector.broadcast %82 : f32 to vector<8x128xf32>
    %384 = arith.mulf %376, %383 : vector<8x128xf32>
    %385 = arith.addf %349, %384 : vector<8x128xf32>
    %386 = vector.broadcast %83 : f32 to vector<8x128xf32>
    %387 = arith.mulf %376, %386 : vector<8x128xf32>
    %388 = arith.addf %352, %387 : vector<8x128xf32>
    %389 = vector.broadcast %84 : f32 to vector<8x128xf32>
    %390 = arith.mulf %376, %389 : vector<8x128xf32>
    %391 = arith.addf %355, %390 : vector<8x128xf32>
    %392 = vector.broadcast %85 : f32 to vector<8x128xf32>
    %393 = arith.mulf %376, %392 : vector<8x128xf32>
    %394 = arith.addf %358, %393 : vector<8x128xf32>
    %395 = vector.broadcast %86 : f32 to vector<8x128xf32>
    %396 = arith.mulf %376, %395 : vector<8x128xf32>
    %397 = arith.addf %361, %396 : vector<8x128xf32>
    %398 = vector.broadcast %87 : f32 to vector<8x128xf32>
    %399 = arith.mulf %376, %398 : vector<8x128xf32>
    %400 = arith.addf %364, %399 : vector<8x128xf32>
    %401 = vector.broadcast %88 : f32 to vector<8x128xf32>
    %402 = arith.mulf %376, %401 : vector<8x128xf32>
    %403 = arith.addf %367, %402 : vector<8x128xf32>
    %404 = vector.broadcast %89 : f32 to vector<8x128xf32>
    %405 = arith.mulf %376, %404 : vector<8x128xf32>
    %406 = arith.addf %370, %405 : vector<8x128xf32>
    %407 = vector.broadcast %7 : f32 to vector<8x128xf32>
    %408 = arith.mulf %144, %407 : vector<8x128xf32>
    %409 = vector.broadcast %17 : f32 to vector<8x128xf32>
    %410 = arith.addf %408, %409 : vector<8x128xf32>
    %cst_7 = arith.constant 0.000000e+00 : f32
    %411 = vector.broadcast %cst_7 : f32 to vector<8x128xf32>
    %412 = arith.maximumf %410, %411 : vector<8x128xf32>
    %413 = vector.broadcast %90 : f32 to vector<8x128xf32>
    %414 = arith.mulf %412, %413 : vector<8x128xf32>
    %415 = arith.addf %379, %414 : vector<8x128xf32>
    %416 = vector.broadcast %91 : f32 to vector<8x128xf32>
    %417 = arith.mulf %412, %416 : vector<8x128xf32>
    %418 = arith.addf %382, %417 : vector<8x128xf32>
    %419 = vector.broadcast %92 : f32 to vector<8x128xf32>
    %420 = arith.mulf %412, %419 : vector<8x128xf32>
    %421 = arith.addf %385, %420 : vector<8x128xf32>
    %422 = vector.broadcast %93 : f32 to vector<8x128xf32>
    %423 = arith.mulf %412, %422 : vector<8x128xf32>
    %424 = arith.addf %388, %423 : vector<8x128xf32>
    %425 = vector.broadcast %94 : f32 to vector<8x128xf32>
    %426 = arith.mulf %412, %425 : vector<8x128xf32>
    %427 = arith.addf %391, %426 : vector<8x128xf32>
    %428 = vector.broadcast %95 : f32 to vector<8x128xf32>
    %429 = arith.mulf %412, %428 : vector<8x128xf32>
    %430 = arith.addf %394, %429 : vector<8x128xf32>
    %431 = vector.broadcast %96 : f32 to vector<8x128xf32>
    %432 = arith.mulf %412, %431 : vector<8x128xf32>
    %433 = arith.addf %397, %432 : vector<8x128xf32>
    %434 = vector.broadcast %97 : f32 to vector<8x128xf32>
    %435 = arith.mulf %412, %434 : vector<8x128xf32>
    %436 = arith.addf %400, %435 : vector<8x128xf32>
    %437 = vector.broadcast %98 : f32 to vector<8x128xf32>
    %438 = arith.mulf %412, %437 : vector<8x128xf32>
    %439 = arith.addf %403, %438 : vector<8x128xf32>
    %440 = vector.broadcast %99 : f32 to vector<8x128xf32>
    %441 = arith.mulf %412, %440 : vector<8x128xf32>
    %442 = arith.addf %406, %441 : vector<8x128xf32>
    %443 = vector.broadcast %8 : f32 to vector<8x128xf32>
    %444 = arith.mulf %144, %443 : vector<8x128xf32>
    %445 = vector.broadcast %18 : f32 to vector<8x128xf32>
    %446 = arith.addf %444, %445 : vector<8x128xf32>
    %cst_8 = arith.constant 0.000000e+00 : f32
    %447 = vector.broadcast %cst_8 : f32 to vector<8x128xf32>
    %448 = arith.maximumf %446, %447 : vector<8x128xf32>
    %449 = vector.broadcast %100 : f32 to vector<8x128xf32>
    %450 = arith.mulf %448, %449 : vector<8x128xf32>
    %451 = arith.addf %415, %450 : vector<8x128xf32>
    %452 = vector.broadcast %101 : f32 to vector<8x128xf32>
    %453 = arith.mulf %448, %452 : vector<8x128xf32>
    %454 = arith.addf %418, %453 : vector<8x128xf32>
    %455 = vector.broadcast %102 : f32 to vector<8x128xf32>
    %456 = arith.mulf %448, %455 : vector<8x128xf32>
    %457 = arith.addf %421, %456 : vector<8x128xf32>
    %458 = vector.broadcast %103 : f32 to vector<8x128xf32>
    %459 = arith.mulf %448, %458 : vector<8x128xf32>
    %460 = arith.addf %424, %459 : vector<8x128xf32>
    %461 = vector.broadcast %104 : f32 to vector<8x128xf32>
    %462 = arith.mulf %448, %461 : vector<8x128xf32>
    %463 = arith.addf %427, %462 : vector<8x128xf32>
    %464 = vector.broadcast %105 : f32 to vector<8x128xf32>
    %465 = arith.mulf %448, %464 : vector<8x128xf32>
    %466 = arith.addf %430, %465 : vector<8x128xf32>
    %467 = vector.broadcast %106 : f32 to vector<8x128xf32>
    %468 = arith.mulf %448, %467 : vector<8x128xf32>
    %469 = arith.addf %433, %468 : vector<8x128xf32>
    %470 = vector.broadcast %107 : f32 to vector<8x128xf32>
    %471 = arith.mulf %448, %470 : vector<8x128xf32>
    %472 = arith.addf %436, %471 : vector<8x128xf32>
    %473 = vector.broadcast %108 : f32 to vector<8x128xf32>
    %474 = arith.mulf %448, %473 : vector<8x128xf32>
    %475 = arith.addf %439, %474 : vector<8x128xf32>
    %476 = vector.broadcast %109 : f32 to vector<8x128xf32>
    %477 = arith.mulf %448, %476 : vector<8x128xf32>
    %478 = arith.addf %442, %477 : vector<8x128xf32>
    %479 = vector.broadcast %9 : f32 to vector<8x128xf32>
    %480 = arith.mulf %144, %479 : vector<8x128xf32>
    %481 = vector.broadcast %19 : f32 to vector<8x128xf32>
    %482 = arith.addf %480, %481 : vector<8x128xf32>
    %cst_9 = arith.constant 0.000000e+00 : f32
    %483 = vector.broadcast %cst_9 : f32 to vector<8x128xf32>
    %484 = arith.maximumf %482, %483 : vector<8x128xf32>
    %485 = vector.broadcast %110 : f32 to vector<8x128xf32>
    %486 = arith.mulf %484, %485 : vector<8x128xf32>
    %487 = arith.addf %451, %486 : vector<8x128xf32>
    %488 = vector.broadcast %111 : f32 to vector<8x128xf32>
    %489 = arith.mulf %484, %488 : vector<8x128xf32>
    %490 = arith.addf %454, %489 : vector<8x128xf32>
    %491 = vector.broadcast %112 : f32 to vector<8x128xf32>
    %492 = arith.mulf %484, %491 : vector<8x128xf32>
    %493 = arith.addf %457, %492 : vector<8x128xf32>
    %494 = vector.broadcast %113 : f32 to vector<8x128xf32>
    %495 = arith.mulf %484, %494 : vector<8x128xf32>
    %496 = arith.addf %460, %495 : vector<8x128xf32>
    %497 = vector.broadcast %114 : f32 to vector<8x128xf32>
    %498 = arith.mulf %484, %497 : vector<8x128xf32>
    %499 = arith.addf %463, %498 : vector<8x128xf32>
    %500 = vector.broadcast %115 : f32 to vector<8x128xf32>
    %501 = arith.mulf %484, %500 : vector<8x128xf32>
    %502 = arith.addf %466, %501 : vector<8x128xf32>
    %503 = vector.broadcast %116 : f32 to vector<8x128xf32>
    %504 = arith.mulf %484, %503 : vector<8x128xf32>
    %505 = arith.addf %469, %504 : vector<8x128xf32>
    %506 = vector.broadcast %117 : f32 to vector<8x128xf32>
    %507 = arith.mulf %484, %506 : vector<8x128xf32>
    %508 = arith.addf %472, %507 : vector<8x128xf32>
    %509 = vector.broadcast %118 : f32 to vector<8x128xf32>
    %510 = arith.mulf %484, %509 : vector<8x128xf32>
    %511 = arith.addf %475, %510 : vector<8x128xf32>
    %512 = vector.broadcast %119 : f32 to vector<8x128xf32>
    %513 = arith.mulf %484, %512 : vector<8x128xf32>
    %514 = arith.addf %478, %513 : vector<8x128xf32>
    %515 = vector.broadcast %140 : f32 to vector<8x128xf32>
    %cst_10 = arith.constant 0.000000e+00 : f32
    %516 = vector.broadcast %cst_10 : f32 to vector<8x128xf32>
    %517 = arith.maximumf %487, %516 : vector<8x128xf32>
    %518 = vector.broadcast %130 : f32 to vector<8x128xf32>
    %519 = arith.mulf %517, %518 : vector<8x128xf32>
    %520 = arith.addf %515, %519 : vector<8x128xf32>
    %cst_11 = arith.constant 0.000000e+00 : f32
    %521 = vector.broadcast %cst_11 : f32 to vector<8x128xf32>
    %522 = arith.maximumf %490, %521 : vector<8x128xf32>
    %523 = vector.broadcast %131 : f32 to vector<8x128xf32>
    %524 = arith.mulf %522, %523 : vector<8x128xf32>
    %525 = arith.addf %520, %524 : vector<8x128xf32>
    %cst_12 = arith.constant 0.000000e+00 : f32
    %526 = vector.broadcast %cst_12 : f32 to vector<8x128xf32>
    %527 = arith.maximumf %493, %526 : vector<8x128xf32>
    %528 = vector.broadcast %132 : f32 to vector<8x128xf32>
    %529 = arith.mulf %527, %528 : vector<8x128xf32>
    %530 = arith.addf %525, %529 : vector<8x128xf32>
    %cst_13 = arith.constant 0.000000e+00 : f32
    %531 = vector.broadcast %cst_13 : f32 to vector<8x128xf32>
    %532 = arith.maximumf %496, %531 : vector<8x128xf32>
    %533 = vector.broadcast %133 : f32 to vector<8x128xf32>
    %534 = arith.mulf %532, %533 : vector<8x128xf32>
    %535 = arith.addf %530, %534 : vector<8x128xf32>
    %cst_14 = arith.constant 0.000000e+00 : f32
    %536 = vector.broadcast %cst_14 : f32 to vector<8x128xf32>
    %537 = arith.maximumf %499, %536 : vector<8x128xf32>
    %538 = vector.broadcast %134 : f32 to vector<8x128xf32>
    %539 = arith.mulf %537, %538 : vector<8x128xf32>
    %540 = arith.addf %535, %539 : vector<8x128xf32>
    %cst_15 = arith.constant 0.000000e+00 : f32
    %541 = vector.broadcast %cst_15 : f32 to vector<8x128xf32>
    %542 = arith.maximumf %502, %541 : vector<8x128xf32>
    %543 = vector.broadcast %135 : f32 to vector<8x128xf32>
    %544 = arith.mulf %542, %543 : vector<8x128xf32>
    %545 = arith.addf %540, %544 : vector<8x128xf32>
    %cst_16 = arith.constant 0.000000e+00 : f32
    %546 = vector.broadcast %cst_16 : f32 to vector<8x128xf32>
    %547 = arith.maximumf %505, %546 : vector<8x128xf32>
    %548 = vector.broadcast %136 : f32 to vector<8x128xf32>
    %549 = arith.mulf %547, %548 : vector<8x128xf32>
    %550 = arith.addf %545, %549 : vector<8x128xf32>
    %cst_17 = arith.constant 0.000000e+00 : f32
    %551 = vector.broadcast %cst_17 : f32 to vector<8x128xf32>
    %552 = arith.maximumf %508, %551 : vector<8x128xf32>
    %553 = vector.broadcast %137 : f32 to vector<8x128xf32>
    %554 = arith.mulf %552, %553 : vector<8x128xf32>
    %555 = arith.addf %550, %554 : vector<8x128xf32>
    %cst_18 = arith.constant 0.000000e+00 : f32
    %556 = vector.broadcast %cst_18 : f32 to vector<8x128xf32>
    %557 = arith.maximumf %511, %556 : vector<8x128xf32>
    %558 = vector.broadcast %138 : f32 to vector<8x128xf32>
    %559 = arith.mulf %557, %558 : vector<8x128xf32>
    %560 = arith.addf %555, %559 : vector<8x128xf32>
    %cst_19 = arith.constant 0.000000e+00 : f32
    %561 = vector.broadcast %cst_19 : f32 to vector<8x128xf32>
    %562 = arith.maximumf %514, %561 : vector<8x128xf32>
    %563 = vector.broadcast %139 : f32 to vector<8x128xf32>
    %564 = arith.mulf %562, %563 : vector<8x128xf32>
    %565 = arith.addf %560, %564 : vector<8x128xf32>
    %566 = arith.index_cast %142 : i32 to index
    %c0_20 = arith.constant 0 : index
    %567 = vector.load %arg3[%566, %c0_20] : memref<8x128xf32, #tpu.memory_space<vmem>>, vector<8x128xf32>
    tpu.vector_store %arg3[%566, %c0_20], %565 {strides = array<i32>} : memref<8x128xf32, #tpu.memory_space<vmem>>, vector<8x128xf32>,
    %c1_i32 = arith.constant 1 : i32
    return
  }
  func.func @transform_0(%arg0: i32) -> i32 {
    %c0_i32 = arith.constant 0 : i32
    %c0_i32_0 = arith.constant 0 : i32
    return %c0_i32 : i32
  }
  func.func @transform_1(%arg0: i32) -> (i32, i32) {
    %c0_i32 = arith.constant 0 : i32
    %c0_i32_0 = arith.constant 0 : i32
    return %arg0, %c0_i32 : i32, i32
  }
  func.func @transform_2(%arg0: i32) -> (i32, i32) {
    %c0_i32 = arith.constant 0 : i32
    %c0_i32_0 = arith.constant 0 : i32
    return %arg0, %c0_i32 : i32, i32
  }
}

</mosaic_0001>

<llo_original>
// kernel: tpu_custom_call.1
$region0: #{tpu_custom_call.1}
  #allocation0 [shape = 'u32[]', space=smem, size = 0x4, offset = 0x4, fixed_abs, tag = 'smem constant byte address 0x4 - core index']
  #allocation1 [shape = 'u32[144,128]{1,0:T(1,128)}', space=vmem, size = 0x12000, scoped, tag = 'internal scratch']
  %s0 = inlined_call_operand.hbm [shape: f32[141], index: 0, kind: input, shape index: {}]
  %s1 = inlined_call_operand.hbm [shape: f32[8,128], index: 1, kind: input, shape index: {}]
  %s2 = inlined_call_operand.hbm [shape: f32[8,128], index: 2, kind: output, shape index: {}]
  %s3 = sld [smem:[#allocation0]]
  $region26: #{tpu_custom_call.1} parent=0
    _
  %s5 = ssub.s32 1, %s3
  %s6 = scalar_select 0, %s5, %s3
  $region1: #{tpu_custom_call.1} parent=0
    #allocation2 [shape = 'u8[1024]{0}', space=smem, size = 0x400, scoped, tag = 'input window, operand 0, single buffered']
    #allocation3 [shape = 's32[1]{0}', space=sflag, size = 0x4, scoped, tag = 'scoped memory for tpu_custom_call.1']
    #allocation4 [shape = 's32[1]{0}', space=sflag, size = 0x4, scoped, tag = 'scoped memory for tpu_custom_call.1']
    #allocation5 [shape = 's32[1]{0}', space=sflag, size = 0x4, scoped, tag = 'scoped memory for tpu_custom_call.1']
    #allocation6 [shape = 'u8[4096]{0}', space=vmem, size = 0x1000, scoped, tag = 'input window, operand 1, single buffered']
    #allocation7 [shape = 'u8[4096]{0}', space=vmem, size = 0x1000, scoped, tag = 'output window, operand 0, single buffered']
    %7 = vsyncpa [#allocation5], 0
    %8 = vsyncpa [#allocation3], 0
    %9 = vsyncpa [#allocation4], 0
    // Predicated region
    $region2: #{tpu_custom_call.1} parent=1 // pred_check
      _
    $region3: #{tpu_custom_call.1} parent=1 // pred_check_branch
      %11 = sbr.rel (0) target = $region5
    $region4: #{tpu_custom_call.1} parent=1 // pred_region
      %s13 = ssub.s32 32, 32
      %14 = vsyncadd [#allocation5], %s13
      %17 = dma.hbm_to_smem %s0, 32, [#allocation2], [#allocation5]
    $region5: #{tpu_custom_call.1} parent=1 // pred_fallthru
      _
    // Predicated region
    $region6: #{tpu_custom_call.1} parent=1 // pred_check
      _
    $region7: #{tpu_custom_call.1} parent=1 // pred_check_branch
      %19 = sbr.rel (0) target = $region9
    $region8: #{tpu_custom_call.1} parent=1 // pred_region
      %s21 = ssub.s32 128, 128
      %22 = vsyncadd [#allocation3], %s21
      %s24 = sshll.u32 [#allocation6], 4
      %s25 = int_to_ptr.vmem [resolvable:$true] %s24
      %27 = dma.hbm_to_vmem [thread:$0]  %s1, 128, %s25, [#allocation3]
    $region9: #{tpu_custom_call.1} parent=1 // pred_fallthru
      _
    // Predicated region
    $region10: #{tpu_custom_call.1} parent=1 // pred_check
      _
    $region11: #{tpu_custom_call.1} parent=1 // pred_check_branch
      %29 = sbr.rel (0) target = $region13
    $region12: #{tpu_custom_call.1} parent=1 // pred_region
      %30 = dma.done [#allocation5], 32
    $region13: #{tpu_custom_call.1} parent=1 // pred_fallthru
      _
    // Predicated region
    $region14: #{tpu_custom_call.1} parent=1 // pred_check
      _
    $region15: #{tpu_custom_call.1} parent=1 // pred_check_branch
      %32 = sbr.rel (0) target = $region17
    $region16: #{tpu_custom_call.1} parent=1 // pred_region
      %33 = dma.done [#allocation3], 128
    $region17: #{tpu_custom_call.1} parent=1 // pred_fallthru
      _
    %34 = sfence
    %s35 = sld [smem:[#allocation2]]
    %s36 = sld [smem:[#allocation2 + $0x1]]
    %s37 = sld [smem:[#allocation2 + $0x2]]
    %s38 = sld [smem:[#allocation2 + $0x3]]
    %s39 = sld [smem:[#allocation2 + $0x4]]
    %s40 = sld [smem:[#allocation2 + $0x5]]
    %s41 = sld [smem:[#allocation2 + $0x6]]
    %s42 = sld [smem:[#allocation2 + $0x7]]
    %s43 = sld [smem:[#allocation2 + $0x8]]
    %s44 = sld [smem:[#allocation2 + $0x9]]
    %s45 = sld [smem:[#allocation2 + $0xa]]
    %s46 = sld [smem:[#allocation2 + $0xb]]
    %s47 = sld [smem:[#allocation2 + $0xc]]
    %s48 = sld [smem:[#allocation2 + $0xd]]
    %s49 = sld [smem:[#allocation2 + $0xe]]
    %s50 = sld [smem:[#allocation2 + $0xf]]
    %s51 = sld [smem:[#allocation2 + $0x10]]
    %s52 = sld [smem:[#allocation2 + $0x11]]
    %s53 = sld [smem:[#allocation2 + $0x12]]
    %s54 = sld [smem:[#allocation2 + $0x13]]
    %s55 = sld [smem:[#allocation2 + $0x14]]
    %s56 = sld [smem:[#allocation2 + $0x15]]
    %s57 = sld [smem:[#allocation2 + $0x16]]
    %s58 = sld [smem:[#allocation2 + $0x17]]
    %s59 = sld [smem:[#allocation2 + $0x18]]
    %s60 = sld [smem:[#allocation2 + $0x19]]
    %s61 = sld [smem:[#allocation2 + $0x1a]]
    %s62 = sld [smem:[#allocation2 + $0x1b]]
    %s63 = sld [smem:[#allocation2 + $0x1c]]
    %s64 = sld [smem:[#allocation2 + $0x1d]]
    %s65 = sld [smem:[#allocation2 + $0x1e]]
    %s66 = sld [smem:[#allocation2 + $0x1f]]
    %s67 = sld [smem:[#allocation2 + $0x20]]
    %s68 = sld [smem:[#allocation2 + $0x21]]
    %s69 = sld [smem:[#allocation2 + $0x22]]
    %s70 = sld [smem:[#allocation2 + $0x23]]
    %s71 = sld [smem:[#allocation2 + $0x24]]
    %s72 = sld [smem:[#allocation2 + $0x25]]
    %s73 = sld [smem:[#allocation2 + $0x26]]
    %s74 = sld [smem:[#allocation2 + $0x27]]
    %s75 = sld [smem:[#allocation2 + $0x28]]
    %s76 = sld [smem:[#allocation2 + $0x29]]
    %s77 = sld [smem:[#allocation2 + $0x2a]]
    %s78 = sld [smem:[#allocation2 + $0x2b]]
    %s79 = sld [smem:[#allocation2 + $0x2c]]
    %s80 = sld [smem:[#allocation2 + $0x2d]]
    %s81 = sld [smem:[#allocation2 + $0x2e]]
    %s82 = sld [smem:[#allocation2 + $0x2f]]
    %s83 = sld [smem:[#allocation2 + $0x30]]
    %s84 = sld [smem:[#allocation2 + $0x31]]
    %s85 = sld [smem:[#allocation2 + $0x32]]
    %s86 = sld [smem:[#allocation2 + $0x33]]
    %s87 = sld [smem:[#allocation2 + $0x34]]
    %s88 = sld [smem:[#allocation2 + $0x35]]
    %s89 = sld [smem:[#allocation2 + $0x36]]
    %s90 = sld [smem:[#allocation2 + $0x37]]
    %s91 = sld [smem:[#allocation2 + $0x38]]
    %s92 = sld [smem:[#allocation2 + $0x39]]
    %s93 = sld [smem:[#allocation2 + $0x3a]]
    %s94 = sld [smem:[#allocation2 + $0x3b]]
    %s95 = sld [smem:[#allocation2 + $0x3c]]
    %s96 = sld [smem:[#allocation2 + $0x3d]]
    %s97 = sld [smem:[#allocation2 + $0x3e]]
    %s98 = sld [smem:[#allocation2 + $0x3f]]
    %s99 = sld [smem:[#allocation2 + $0x40]]
    %s100 = sld [smem:[#allocation2 + $0x41]]
    %s101 = sld [smem:[#allocation2 + $0x42]]
    %s102 = sld [smem:[#allocation2 + $0x43]]
    %s103 = sld [smem:[#allocation2 + $0x44]]
    %s104 = sld [smem:[#allocation2 + $0x45]]
    %s105 = sld [smem:[#allocation2 + $0x46]]
    %s106 = sld [smem:[#allocation2 + $0x47]]
    %s107 = sld [smem:[#allocation2 + $0x48]]
    %s108 = sld [smem:[#allocation2 + $0x49]]
    %s109 = sld [smem:[#allocation2 + $0x4a]]
    %s110 = sld [smem:[#allocation2 + $0x4b]]
    %s111 = sld [smem:[#allocation2 + $0x4c]]
    %s112 = sld [smem:[#allocation2 + $0x4d]]
    %s113 = sld [smem:[#allocation2 + $0x4e]]
    %s114 = sld [smem:[#allocation2 + $0x4f]]
    %s115 = sld [smem:[#allocation2 + $0x50]]
    %s116 = sld [smem:[#allocation2 + $0x51]]
    %s117 = sld [smem:[#allocation2 + $0x52]]
    %s118 = sld [smem:[#allocation2 + $0x53]]
    %s119 = sld [smem:[#allocation2 + $0x54]]
    %s120 = sld [smem:[#allocation2 + $0x55]]
    %s121 = sld [smem:[#allocation2 + $0x56]]
    %s122 = sld [smem:[#allocation2 + $0x57]]
    %s123 = sld [smem:[#allocation2 + $0x58]]
    %s124 = sld [smem:[#allocation2 + $0x59]]
    %s125 = sld [smem:[#allocation2 + $0x5a]]
    %s126 = sld [smem:[#allocation2 + $0x5b]]
    %s127 = sld [smem:[#allocation2 + $0x5c]]
    %s128 = sld [smem:[#allocation2 + $0x5d]]
    %s129 = sld [smem:[#allocation2 + $0x5e]]
    %s130 = sld [smem:[#allocation2 + $0x5f]]
    %s131 = sld [smem:[#allocation2 + $0x60]]
    %s132 = sld [smem:[#allocation2 + $0x61]]
    %s133 = sld [smem:[#allocation2 + $0x62]]
    %s134 = sld [smem:[#allocation2 + $0x63]]
    %s135 = sld [smem:[#allocation2 + $0x64]]
    %s136 = sld [smem:[#allocation2 + $0x65]]
    %s137 = sld [smem:[#allocation2 + $0x66]]
    %s138 = sld [smem:[#allocation2 + $0x67]]
    %s139 = sld [smem:[#allocation2 + $0x68]]
    %s140 = sld [smem:[#allocation2 + $0x69]]
    %s141 = sld [smem:[#allocation2 + $0x6a]]
    %s142 = sld [smem:[#allocation2 + $0x6b]]
    %s143 = sld [smem:[#allocation2 + $0x6c]]
    %s144 = sld [smem:[#allocation2 + $0x6d]]
    %s145 = sld [smem:[#allocation2 + $0x6e]]
    %s146 = sld [smem:[#allocation2 + $0x6f]]
    %s147 = sld [smem:[#allocation2 + $0x70]]
    %s148 = sld [smem:[#allocation2 + $0x71]]
    %s149 = sld [smem:[#allocation2 + $0x72]]
    %s150 = sld [smem:[#allocation2 + $0x73]]
    %s151 = sld [smem:[#allocation2 + $0x74]]
    %s152 = sld [smem:[#allocation2 + $0x75]]
    %s153 = sld [smem:[#allocation2 + $0x76]]
    %s154 = sld [smem:[#allocation2 + $0x77]]
    %s155 = sld [smem:[#allocation2 + $0x78]]
    %s156 = sld [smem:[#allocation2 + $0x79]]
    %s157 = sld [smem:[#allocation2 + $0x7a]]
    %s158 = sld [smem:[#allocation2 + $0x7b]]
    %s159 = sld [smem:[#allocation2 + $0x7c]]
    %s160 = sld [smem:[#allocation2 + $0x7d]]
    %s161 = sld [smem:[#allocation2 + $0x7e]]
    %s162 = sld [smem:[#allocation2 + $0x7f]]
    %s163 = sld [smem:[#allocation2 + $0x80]]
    %s164 = sld [smem:[#allocation2 + $0x81]]
    %s165 = sld [smem:[#allocation2 + $0x82]]
    %s166 = sld [smem:[#allocation2 + $0x83]]
    %s167 = sld [smem:[#allocation2 + $0x84]]
    %s168 = sld [smem:[#allocation2 + $0x85]]
    %s169 = sld [smem:[#allocation2 + $0x86]]
    %s170 = sld [smem:[#allocation2 + $0x87]]
    %s171 = sld [smem:[#allocation2 + $0x88]]
    %s172 = sld [smem:[#allocation2 + $0x89]]
    %s173 = sld [smem:[#allocation2 + $0x8a]]
    %s174 = sld [smem:[#allocation2 + $0x8b]]
    %s175 = sld [smem:[#allocation2 + $0x8c]]
    %v176 = vld [vmem:[#allocation6] sm:$0xff]
    %v177 = vstv %s155
    %v178 = vstv %s156
    %v179 = vstv %s157
    %v180 = vstv %s158
    %v181 = vstv %s159
    %v182 = vstv %s160
    %v183 = vstv %s161
    %v184 = vstv %s162
    %v185 = vstv %s163
    %v186 = vstv %s164
    %v187 = vstv %s35
    %v188 = vmul.f32 %v176, %v187
    %v189 = vstv %s45
    %v190 = vadd.f32 %v188, %v189
    %v191 = vmax.f32 %v190, 0.0
    %v192 = vstv %s55
    %v193 = vmul.f32 %v191, %v192
    %v194 = vadd.f32 %v177, %v193
    %v195 = vstv %s56
    %v196 = vmul.f32 %v191, %v195
    %v197 = vadd.f32 %v178, %v196
    %v198 = vstv %s57
    %v199 = vmul.f32 %v191, %v198
    %v200 = vadd.f32 %v179, %v199
    %v201 = vstv %s58
    %v202 = vmul.f32 %v191, %v201
    %v203 = vadd.f32 %v180, %v202
    %v204 = vstv %s59
    %v205 = vmul.f32 %v191, %v204
    %v206 = vadd.f32 %v181, %v205
    %v207 = vstv %s60
    %v208 = vmul.f32 %v191, %v207
    %v209 = vadd.f32 %v182, %v208
    %v210 = vstv %s61
    %v211 = vmul.f32 %v191, %v210
    %v212 = vadd.f32 %v183, %v211
    %v213 = vstv %s62
    %v214 = vmul.f32 %v191, %v213
    %v215 = vadd.f32 %v184, %v214
    %v216 = vstv %s63
    %v217 = vmul.f32 %v191, %v216
    %v218 = vadd.f32 %v185, %v217
    %v219 = vstv %s64
    %v220 = vmul.f32 %v191, %v219
    %v221 = vadd.f32 %v186, %v220
    %v222 = vstv %s36
    %v223 = vmul.f32 %v176, %v222
    %v224 = vstv %s46
    %v225 = vadd.f32 %v223, %v224
    %v226 = vmax.f32 %v225, 0.0
    %v227 = vstv %s65
    %v228 = vmul.f32 %v226, %v227
    %v229 = vadd.f32 %v194, %v228
    %v230 = vstv %s66
    %v231 = vmul.f32 %v226, %v230
    %v232 = vadd.f32 %v197, %v231
    %v233 = vstv %s67
    %v234 = vmul.f32 %v226, %v233
    %v235 = vadd.f32 %v200, %v234
    %v236 = vstv %s68
    %v237 = vmul.f32 %v226, %v236
    %v238 = vadd.f32 %v203, %v237
    %v239 = vstv %s69
    %v240 = vmul.f32 %v226, %v239
    %v241 = vadd.f32 %v206, %v240
    %v242 = vstv %s70
    %v243 = vmul.f32 %v226, %v242
    %v244 = vadd.f32 %v209, %v243
    %v245 = vstv %s71
    %v246 = vmul.f32 %v226, %v245
    %v247 = vadd.f32 %v212, %v246
    %v248 = vstv %s72
    %v249 = vmul.f32 %v226, %v248
    %v250 = vadd.f32 %v215, %v249
    %v251 = vstv %s73
    %v252 = vmul.f32 %v226, %v251
    %v253 = vadd.f32 %v218, %v252
    %v254 = vstv %s74
    %v255 = vmul.f32 %v226, %v254
    %v256 = vadd.f32 %v221, %v255
    %v257 = vstv %s37
    %v258 = vmul.f32 %v176, %v257
    %v259 = vstv %s47
    %v260 = vadd.f32 %v258, %v259
    %v261 = vmax.f32 %v260, 0.0
    %v262 = vstv %s75
    %v263 = vmul.f32 %v261, %v262
    %v264 = vadd.f32 %v229, %v263
    %v265 = vstv %s76
    %v266 = vmul.f32 %v261, %v265
    %v267 = vadd.f32 %v232, %v266
    %v268 = vstv %s77
    %v269 = vmul.f32 %v261, %v268
    %v270 = vadd.f32 %v235, %v269
    %v271 = vstv %s78
    %v272 = vmul.f32 %v261, %v271
    %v273 = vadd.f32 %v238, %v272
    %v274 = vstv %s79
    %v275 = vmul.f32 %v261, %v274
    %v276 = vadd.f32 %v241, %v275
    %v277 = vstv %s80
    %v278 = vmul.f32 %v261, %v277
    %v279 = vadd.f32 %v244, %v278
    %v280 = vstv %s81
    %v281 = vmul.f32 %v261, %v280
    %v282 = vadd.f32 %v247, %v281
    %v283 = vstv %s82
    %v284 = vmul.f32 %v261, %v283
    %v285 = vadd.f32 %v250, %v284
    %v286 = vstv %s83
    %v287 = vmul.f32 %v261, %v286
    %v288 = vadd.f32 %v253, %v287
    %v289 = vstv %s84
    %v290 = vmul.f32 %v261, %v289
    %v291 = vadd.f32 %v256, %v290
    %v292 = vstv %s38
    %v293 = vmul.f32 %v176, %v292
    %v294 = vstv %s48
    %v295 = vadd.f32 %v293, %v294
    %v296 = vmax.f32 %v295, 0.0
    %v297 = vstv %s85
    %v298 = vmul.f32 %v296, %v297
    %v299 = vadd.f32 %v264, %v298
    %v300 = vstv %s86
    %v301 = vmul.f32 %v296, %v300
    %v302 = vadd.f32 %v267, %v301
    %v303 = vstv %s87
    %v304 = vmul.f32 %v296, %v303
    %v305 = vadd.f32 %v270, %v304
    %v306 = vstv %s88
    %v307 = vmul.f32 %v296, %v306
    %v308 = vadd.f32 %v273, %v307
    %v309 = vstv %s89
    %v310 = vmul.f32 %v296, %v309
    %v311 = vadd.f32 %v276, %v310
    %v312 = vstv %s90
    %v313 = vmul.f32 %v296, %v312
    %v314 = vadd.f32 %v279, %v313
    %v315 = vstv %s91
    %v316 = vmul.f32 %v296, %v315
    %v317 = vadd.f32 %v282, %v316
    %v318 = vstv %s92
    %v319 = vmul.f32 %v296, %v318
    %v320 = vadd.f32 %v285, %v319
    %v321 = vstv %s93
    %v322 = vmul.f32 %v296, %v321
    %v323 = vadd.f32 %v288, %v322
    %v324 = vstv %s94
    %v325 = vmul.f32 %v296, %v324
    %v326 = vadd.f32 %v291, %v325
    %v327 = vstv %s39
    %v328 = vmul.f32 %v176, %v327
    %v329 = vstv %s49
    %v330 = vadd.f32 %v328, %v329
    %v331 = vmax.f32 %v330, 0.0
    %v332 = vstv %s95
    %v333 = vmul.f32 %v331, %v332
    %v334 = vadd.f32 %v299, %v333
    %v335 = vstv %s96
    %v336 = vmul.f32 %v331, %v335
    %v337 = vadd.f32 %v302, %v336
    %v338 = vstv %s97
    %v339 = vmul.f32 %v331, %v338
    %v340 = vadd.f32 %v305, %v339
    %v341 = vstv %s98
    %v342 = vmul.f32 %v331, %v341
    %v343 = vadd.f32 %v308, %v342
    %v344 = vstv %s99
    %v345 = vmul.f32 %v331, %v344
    %v346 = vadd.f32 %v311, %v345
    %v347 = vstv %s100
    %v348 = vmul.f32 %v331, %v347
    %v349 = vadd.f32 %v314, %v348
    %v350 = vstv %s101
    %v351 = vmul.f32 %v331, %v350
    %v352 = vadd.f32 %v317, %v351
    %v353 = vstv %s102
    %v354 = vmul.f32 %v331, %v353
    %v355 = vadd.f32 %v320, %v354
    %v356 = vstv %s103
    %v357 = vmul.f32 %v331, %v356
    %v358 = vadd.f32 %v323, %v357
    %v359 = vstv %s104
    %v360 = vmul.f32 %v331, %v359
    %v361 = vadd.f32 %v326, %v360
    %v362 = vstv %s40
    %v363 = vmul.f32 %v176, %v362
    %v364 = vstv %s50
    %v365 = vadd.f32 %v363, %v364
    %v366 = vmax.f32 %v365, 0.0
    %v367 = vstv %s105
    %v368 = vmul.f32 %v366, %v367
    %v369 = vadd.f32 %v334, %v368
    %v370 = vstv %s106
    %v371 = vmul.f32 %v366, %v370
    %v372 = vadd.f32 %v337, %v371
    %v373 = vstv %s107
    %v374 = vmul.f32 %v366, %v373
    %v375 = vadd.f32 %v340, %v374
    %v376 = vstv %s108
    %v377 = vmul.f32 %v366, %v376
    %v378 = vadd.f32 %v343, %v377
    %v379 = vstv %s109
    %v380 = vmul.f32 %v366, %v379
    %v381 = vadd.f32 %v346, %v380
    %v382 = vstv %s110
    %v383 = vmul.f32 %v366, %v382
    %v384 = vadd.f32 %v349, %v383
    %v385 = vstv %s111
    %v386 = vmul.f32 %v366, %v385
    %v387 = vadd.f32 %v352, %v386
    %v388 = vstv %s112
    %v389 = vmul.f32 %v366, %v388
    %v390 = vadd.f32 %v355, %v389
    %v391 = vstv %s113
    %v392 = vmul.f32 %v366, %v391
    %v393 = vadd.f32 %v358, %v392
    %v394 = vstv %s114
    %v395 = vmul.f32 %v366, %v394
    %v396 = vadd.f32 %v361, %v395
    %v397 = vstv %s41
    %v398 = vmul.f32 %v176, %v397
    %v399 = vstv %s51
    %v400 = vadd.f32 %v398, %v399
    %v401 = vmax.f32 %v400, 0.0
    %v402 = vstv %s115
    %v403 = vmul.f32 %v401, %v402
    %v404 = vadd.f32 %v369, %v403
    %v405 = vstv %s116
    %v406 = vmul.f32 %v401, %v405
    %v407 = vadd.f32 %v372, %v406
    %v408 = vstv %s117
    %v409 = vmul.f32 %v401, %v408
    %v410 = vadd.f32 %v375, %v409
    %v411 = vstv %s118
    %v412 = vmul.f32 %v401, %v411
    %v413 = vadd.f32 %v378, %v412
    %v414 = vstv %s119
    %v415 = vmul.f32 %v401, %v414
    %v416 = vadd.f32 %v381, %v415
    %v417 = vstv %s120
    %v418 = vmul.f32 %v401, %v417
    %v419 = vadd.f32 %v384, %v418
    %v420 = vstv %s121
    %v421 = vmul.f32 %v401, %v420
    %v422 = vadd.f32 %v387, %v421
    %v423 = vstv %s122
    %v424 = vmul.f32 %v401, %v423
    %v425 = vadd.f32 %v390, %v424
    %v426 = vstv %s123
    %v427 = vmul.f32 %v401, %v426
    %v428 = vadd.f32 %v393, %v427
    %v429 = vstv %s124
    %v430 = vmul.f32 %v401, %v429
    %v431 = vadd.f32 %v396, %v430
    %v432 = vstv %s42
    %v433 = vmul.f32 %v176, %v432
    %v434 = vstv %s52
    %v435 = vadd.f32 %v433, %v434
    %v436 = vmax.f32 %v435, 0.0
    %v437 = vstv %s125
    %v438 = vmul.f32 %v436, %v437
    %v439 = vadd.f32 %v404, %v438
    %v440 = vstv %s126
    %v441 = vmul.f32 %v436, %v440
    %v442 = vadd.f32 %v407, %v441
    %v443 = vstv %s127
    %v444 = vmul.f32 %v436, %v443
    %v445 = vadd.f32 %v410, %v444
    %v446 = vstv %s128
    %v447 = vmul.f32 %v436, %v446
    %v448 = vadd.f32 %v413, %v447
    %v449 = vstv %s129
    %v450 = vmul.f32 %v436, %v449
    %v451 = vadd.f32 %v416, %v450
    %v452 = vstv %s130
    %v453 = vmul.f32 %v436, %v452
    %v454 = vadd.f32 %v419, %v453
    %v455 = vstv %s131
    %v456 = vmul.f32 %v436, %v455
    %v457 = vadd.f32 %v422, %v456
    %v458 = vstv %s132
    %v459 = vmul.f32 %v436, %v458
    %v460 = vadd.f32 %v425, %v459
    %v461 = vstv %s133
    %v462 = vmul.f32 %v436, %v461
    %v463 = vadd.f32 %v428, %v462
    %v464 = vstv %s134
    %v465 = vmul.f32 %v436, %v464
    %v466 = vadd.f32 %v431, %v465
    %v467 = vstv %s43
    %v468 = vmul.f32 %v176, %v467
    %v469 = vstv %s53
    %v470 = vadd.f32 %v468, %v469
    %v471 = vmax.f32 %v470, 0.0
    %v472 = vstv %s135
    %v473 = vmul.f32 %v471, %v472
    %v474 = vadd.f32 %v439, %v473
    %v475 = vstv %s136
    %v476 = vmul.f32 %v471, %v475
    %v477 = vadd.f32 %v442, %v476
    %v478 = vstv %s137
    %v479 = vmul.f32 %v471, %v478
    %v480 = vadd.f32 %v445, %v479
    %v481 = vstv %s138
    %v482 = vmul.f32 %v471, %v481
    %v483 = vadd.f32 %v448, %v482
    %v484 = vstv %s139
    %v485 = vmul.f32 %v471, %v484
    %v486 = vadd.f32 %v451, %v485
    %v487 = vstv %s140
    %v488 = vmul.f32 %v471, %v487
    %v489 = vadd.f32 %v454, %v488
    %v490 = vstv %s141
    %v491 = vmul.f32 %v471, %v490
    %v492 = vadd.f32 %v457, %v491
    %v493 = vstv %s142
    %v494 = vmul.f32 %v471, %v493
    %v495 = vadd.f32 %v460, %v494
    %v496 = vstv %s143
    %v497 = vmul.f32 %v471, %v496
    %v498 = vadd.f32 %v463, %v497
    %v499 = vstv %s144
    %v500 = vmul.f32 %v471, %v499
    %v501 = vadd.f32 %v466, %v500
    %v502 = vstv %s44
    %v503 = vmul.f32 %v176, %v502
    %v504 = vstv %s54
    %v505 = vadd.f32 %v503, %v504
    %v506 = vmax.f32 %v505, 0.0
    %v507 = vstv %s145
    %v508 = vmul.f32 %v506, %v507
    %v509 = vadd.f32 %v474, %v508
    %v510 = vstv %s146
    %v511 = vmul.f32 %v506, %v510
    %v512 = vadd.f32 %v477, %v511
    %v513 = vstv %s147
    %v514 = vmul.f32 %v506, %v513
    %v515 = vadd.f32 %v480, %v514
    %v516 = vstv %s148
    %v517 = vmul.f32 %v506, %v516
    %v518 = vadd.f32 %v483, %v517
    %v519 = vstv %s149
    %v520 = vmul.f32 %v506, %v519
    %v521 = vadd.f32 %v486, %v520
    %v522 = vstv %s150
    %v523 = vmul.f32 %v506, %v522
    %v524 = vadd.f32 %v489, %v523
    %v525 = vstv %s151
    %v526 = vmul.f32 %v506, %v525
    %v527 = vadd.f32 %v492, %v526
    %v528 = vstv %s152
    %v529 = vmul.f32 %v506, %v528
    %v530 = vadd.f32 %v495, %v529
    %v531 = vstv %s153
    %v532 = vmul.f32 %v506, %v531
    %v533 = vadd.f32 %v498, %v532
    %v534 = vstv %s154
    %v535 = vmul.f32 %v506, %v534
    %v536 = vadd.f32 %v501, %v535
    %v537 = vstv %s175
    %v538 = vmax.f32 %v509, 0.0
    %v539 = vstv %s165
    %v540 = vmul.f32 %v538, %v539
    %v541 = vadd.f32 %v537, %v540
    %v542 = vmax.f32 %v512, 0.0
    %v543 = vstv %s166
    %v544 = vmul.f32 %v542, %v543
    %v545 = vadd.f32 %v541, %v544
    %v546 = vmax.f32 %v515, 0.0
    %v547 = vstv %s167
    %v548 = vmul.f32 %v546, %v547
    %v549 = vadd.f32 %v545, %v548
    %v550 = vmax.f32 %v518, 0.0
    %v551 = vstv %s168
    %v552 = vmul.f32 %v550, %v551
    %v553 = vadd.f32 %v549, %v552
    %v554 = vmax.f32 %v521, 0.0
    %v555 = vstv %s169
    %v556 = vmul.f32 %v554, %v555
    %v557 = vadd.f32 %v553, %v556
    %v558 = vmax.f32 %v524, 0.0
    %v559 = vstv %s170
    %v560 = vmul.f32 %v558, %v559
    %v561 = vadd.f32 %v557, %v560
    %v562 = vmax.f32 %v527, 0.0
    %v563 = vstv %s171
    %v564 = vmul.f32 %v562, %v563
    %v565 = vadd.f32 %v561, %v564
    %v566 = vmax.f32 %v530, 0.0
    %v567 = vstv %s172
    %v568 = vmul.f32 %v566, %v567
    %v569 = vadd.f32 %v565, %v568
    %v570 = vmax.f32 %v533, 0.0
    %v571 = vstv %s173
    %v572 = vmul.f32 %v570, %v571
    %v573 = vadd.f32 %v569, %v572
    %v574 = vmax.f32 %v536, 0.0
    %v575 = vstv %s174
    %v576 = vmul.f32 %v574, %v575
    %v577 = vadd.f32 %v573, %v576
    %578 = vst [vmem:[#allocation7] sm:$0xff] %v577
    // Predicated region
    $region18: #{tpu_custom_call.1} parent=1 // pred_check
      _
    $region19: #{tpu_custom_call.1} parent=1 // pred_check_branch
      %580 = sbr.rel (0) target = $region21
    $region20: #{tpu_custom_call.1} parent=1 // pred_region
      %s582 = ssub.s32 128, 128
      %583 = vsyncadd [#allocation4], %s582
      %s585 = sshll.u32 [#allocation7], 4
      %s586 = int_to_ptr.vmem [resolvable:$true] %s585
      %588 = dma.vmem_to_hbm [thread:$0]  %s586, 128, %s2, [#allocation4]
    $region21: #{tpu_custom_call.1} parent=1 // pred_fallthru
      _
    // Predicated region
    $region22: #{tpu_custom_call.1} parent=1 // pred_check
      _
    $region23: #{tpu_custom_call.1} parent=1 // pred_check_branch
      %590 = sbr.rel (0) target = $region25
    $region24: #{tpu_custom_call.1} parent=1 // pred_region
      %591 = dma.done [#allocation4], 128
    $region25: #{tpu_custom_call.1} parent=1 // pred_fallthru
      _
    %592 = vsyncpa [#allocation3], 1
    %593 = vsyncpa [#allocation4], 1
    %594 = vsyncpa [#allocation5], 1

</llo_original>
